<compile_context>
chip_gen: v7x
topology: tpu7x:2x2x1
jax: 0.10.0
libtpu: 0.0.40
codegen_flags: <defaults>
</compile_context>

<pallas_src>
import functools
import math

import jax
import jax.numpy as jnp
from jax import lax
from jax.experimental import pallas as pl
from jax.experimental.pallas import tpu as pltpu

_NEG_INF = -1e30   # finite "-inf" so fully-masked tiles never produce NaN
_SLOPE = 0.2       # GATv2Conv negative_slope default


# ---------------------------------------------------------------------------
# Stage 1: fused linear projections (hoisted out of the per-adj-tile loop)
#   y   = x @ [W_l | W_r] + [b_l | b_r]
#   x_l = y[:, :HC] ; x_r = y[:, HC:] ; x_lT = x_l.T (transposed once, hoisted)
# ---------------------------------------------------------------------------
def gatv2_proj_kernel(x_ref, w_ref, b_ref, xl_ref, xr_ref, xlt_ref, *, hc):
    y = jnp.dot(x_ref[...], w_ref[...],
                preferred_element_type=jnp.float32) + b_ref[...]
    xl = y[:, :hc]
    xr = y[:, hc:]
    xl_ref[...] = xl.astype(xl_ref.dtype)
    xr_ref[...] = xr.astype(xr_ref.dtype)
    xlt_ref[...] = xl.T.astype(xlt_ref.dtype)   # hoisted transpose for stage 2


# ---------------------------------------------------------------------------
# Stage 2: GATv2 attention + neighbor aggregation (online softmax over j tiles)
# ---------------------------------------------------------------------------
def gatv2_attn_kernel(xr_ref, xl_ref, xlt_ref, adj_ref, att_ref, bias_ref,
                      o_ref, m_sc, l_sc, acc_sc, *, heads, ch):
    i = pl.program_id(0)
    j = pl.program_id(1)
    tm, tk = adj_ref.shape

    @pl.when(j == 0)
    def _init():
        m_sc[...] = jnp.full_like(m_sc, _NEG_INF)
        l_sc[...] = jnp.zeros_like(l_sc)
        acc_sc[...] = jnp.zeros_like(acc_sc)

    # Validity mask: adjacency (int8) OR in-kernel self-loop (i == j globally).
    row_ids = i * tm + lax.broadcasted_iota(jnp.int32, (tm, tk), 0)
    col_ids = j * tk + lax.broadcasted_iota(jnp.int32, (tm, tk), 1)
    valid = jnp.logical_or(adj_ref[...] != 0, row_ids == col_ids)   # [TM, TK]
    mask_bias = jnp.where(valid, 0.0, _NEG_INF).astype(jnp.float32)

    xr = xr_ref[...].astype(jnp.float32)      # [TM, H*C]  (target features)
    xlt = xlt_ref[...].astype(jnp.float32)    # [H*C, TK]  (source features, transposed)
    xl = xl_ref[...]                           # [TK, H*C]  (source features, for dot)

    acc_all = acc_sc[...]                      # [TM, H*C]  previous accumulator
    acc_parts = []

    for h in range(heads):                     # static unroll, H is small
        sl = slice(h * ch, (h + 1) * ch)
        xr_h = xr[:, sl]                       # [TM, C]
        xlt_h = xlt[sl, :]                     # [C, TK]

        # Lane-dense GATv2 scores on [TM, TK] vregs:
        #   scores[m,k] = sum_c a[c] * leaky_relu(x_r[m,c] + x_l[k,c])
        scores = mask_bias                     # start from additive mask
        for c in range(ch):
            t = xr_h[:, c:c + 1] + xlt_h[c:c + 1, :]     # [TM, TK]
            t = jnp.maximum(t, _SLOPE * t)               # leaky_relu(., 0.2)
            scores = scores + att_ref[h * ch + c] * t    # scalar from SMEM

        # Online softmax over the j (source-node) reduction axis.
        m_prev = m_sc[h]                                             # [TM, 1]
        m_new = jnp.maximum(m_prev, jnp.max(scores, axis=-1, keepdims=True))
        corr = jnp.exp(m_prev - m_new)                               # [TM, 1]
        p = jnp.where(valid, jnp.exp(scores - m_new), 0.0)           # [TM, TK]
        l_sc[h] = corr * l_sc[h] + jnp.sum(p, axis=-1, keepdims=True)
        m_sc[h] = m_new

        upd = jnp.dot(p.astype(xl.dtype), xl[:, sl],
                      preferred_element_type=jnp.float32)            # [TM, C]
        acc_parts.append(corr * acc_all[:, sl] + upd)

    # Single full-width (128-lane) accumulator store per grid step.
    acc_sc[...] = jnp.concatenate(acc_parts, axis=-1)

    @pl.when(j == pl.num_programs(1) - 1)
    def _finalize():
        acc = acc_sc[...]
        outs = []
        for h in range(heads):
            inv_l = pl.reciprocal(l_sc[h], approx=False)             # [TM, 1]
            outs.append(acc[:, h * ch:(h + 1) * ch] * inv_l)
        o_ref[...] = (jnp.concatenate(outs, axis=-1)
                      + bias_ref[...]).astype(o_ref.dtype)


# ---------------------------------------------------------------------------
# Wrapper
# ---------------------------------------------------------------------------
def gatv2_forward(x, adj, w_l, b_l, w_r, b_r, att, bias, *,
                  tm=None, tk=None, storage_dtype=jnp.float32):
    n, fin = x.shape
    heads, ch = att.shape
    hc = heads * ch
    assert w_l.shape == (fin, hc) and w_r.shape == (fin, hc)
    assert b_l.shape == (hc,) and b_r.shape == (hc,) and bias.shape == (hc,)

    # Adjacency as an int8 mask (4x less O(N^2) HBM->VMEM DMA than f32).
    if adj.dtype != jnp.int8:
        adj = (adj != 0).astype(jnp.int8)

    # Tile sizes.
    if tm is None:
        tm = 128 if n % 128 == 0 else n
    if tk is None:
        tk = next((t for t in (512, 256, 128) if n % t == 0), n)
    assert n % tm == 0 and n % tk == 0
    assert tm == n or tm % 32 == 0      # int8 adj sublane tiling
    assert tk == n or tk % 128 == 0     # lane tiling for adj / x_l^T blocks
    tp = 128 if n % 128 == 0 else n     # projection row tile (x_l^T lane dim)
    assert tp == n or tp % 128 == 0

    sdt = jnp.dtype(storage_dtype)
    w_cat = jnp.concatenate([w_l, w_r], axis=1)              # [fin, 2*HC]
    b_cat = jnp.concatenate([b_l, b_r]).reshape(1, 2 * hc)
    bias2 = bias.reshape(1, hc)
    att_flat = att.reshape(hc)                                # scalars -> SMEM

    cparams1 = pltpu.CompilerParams(
        dimension_semantics=("parallel",),
        vmem_limit_bytes=32 * 1024 * 1024)

    # ---- stage 1: fused projections + hoisted transpose ----------------------
    proj_cost = pl.CostEstimate(
        flops=2 * n * fin * 2 * hc,
        transcendentals=0,
        bytes_accessed=4 * (n * fin + fin * 2 * hc + 2 * hc)
                       + 3 * n * hc * sdt.itemsize)
    xl, xr, xlt = pl.pallas_call(
        functools.partial(gatv2_proj_kernel, hc=hc),
        out_shape=(jax.ShapeDtypeStruct((n, hc), storage_dtype),   # x_l
                   jax.ShapeDtypeStruct((n, hc), storage_dtype),   # x_r
                   jax.ShapeDtypeStruct((hc, n), storage_dtype)),  # x_l^T
        grid=(n // tp,),
        in_specs=[
            pl.BlockSpec((tp, fin), lambda i: (i, 0)),       # x
            pl.BlockSpec((fin, 2 * hc), lambda i: (0, 0)),   # [W_l | W_r]
            pl.BlockSpec((1, 2 * hc), lambda i: (0, 0)),     # [b_l | b_r]
        ],
        out_specs=(pl.BlockSpec((tp, hc), lambda i: (i, 0)),
                   pl.BlockSpec((tp, hc), lambda i: (i, 0)),
                   pl.BlockSpec((hc, tp), lambda i: (0, i))),
        compiler_params=cparams1,
        cost_estimate=proj_cost,
    )(x, w_cat, b_cat)

    # ---- stage 2: attention + aggregation ------------------------------------
    attn_cost = pl.CostEstimate(
        flops=7 * n * n * hc + 8 * n * n * heads,
        transcendentals=n * n * heads,
        bytes_accessed=n * n
                       + (n // tm) * 2 * n * hc * sdt.itemsize   # x_l, x_l^T per row tile
                       + n * hc * sdt.itemsize                   # x_r
                       + 4 * n * hc)                             # output
    cparams2 = pltpu.CompilerParams(
        dimension_semantics=("parallel", "arbitrary"),
        vmem_limit_bytes=32 * 1024 * 1024)

    out = pl.pallas_call(
        functools.partial(gatv2_attn_kernel, heads=heads, ch=ch),
        out_shape=jax.ShapeDtypeStruct((n, hc), jnp.float32),
        grid=(n // tm, n // tk),
        in_specs=[
            pl.BlockSpec((tm, hc), lambda i, j: (i, 0)),       # x_r (targets)
            pl.BlockSpec((tk, hc), lambda i, j: (j, 0)),       # x_l (sources, for dot)
            pl.BlockSpec((hc, tk), lambda i, j: (0, j)),       # x_l^T (lane-dense scores)
            pl.BlockSpec((tm, tk), lambda i, j: (i, j)),       # int8 adjacency tile
            pl.BlockSpec(memory_space=pltpu.MemorySpace.SMEM), # attention vector a
            pl.BlockSpec((1, hc), lambda i, j: (0, 0)),        # final bias
        ],
        out_specs=pl.BlockSpec((tm, hc), lambda i, j: (i, 0)),
        scratch_shapes=[
            pltpu.VMEM((heads, tm, 1), jnp.float32),   # running max (per head)
            pltpu.VMEM((heads, tm, 1), jnp.float32),   # running denom (per head)
            pltpu.VMEM((tm, hc), jnp.float32),         # output accumulator
        ],
        compiler_params=cparams2,
        cost_estimate=attn_cost,
    )(xr, xl, xlt, adj, att_flat, bias2)
    return out


# ---------------------------------------------------------------------------
# Pure-JAX reference (same GATv2 semantics)
# ---------------------------------------------------------------------------
def gatv2_reference(x, adj, w_l, b_l, w_r, b_r, att, bias):
    n = x.shape[0]
    heads, ch = att.shape
    mask = jnp.logical_or(adj != 0, jnp.eye(n, dtype=bool))
    xl = (x @ w_l + b_l).reshape(n, heads, ch)
    xr = (x @ w_r + b_r).reshape(n, heads, ch)
    s = xr[:, None, :, :] + xl[None, :, :, :]            # [i, j, h, c]
    s = jnp.where(s > 0, s, _SLOPE * s)
    e = jnp.einsum('ijhc,hc->ijh', s, att)
    e = jnp.where(mask[:, :, None], e, -jnp.inf)
    alpha = jax.nn.softmax(e, axis=1)
    out = jnp.einsum('ijh,jhc->ihc', alpha, xl)
    return out.reshape(n, heads * ch) + bias


if __name__ == "__main__":
    key = jax.random.PRNGKey(0)
    ks = jax.random.split(key, 8)

    N = 256
    input_dim = 32          # GAT(input_dim, hidden_dim): gc1 = GATv2Conv(input_dim, input_dim, heads=4)
    heads = 4
    ch = input_dim          # per-head out_channels
    hc = heads * ch         # concat=True -> output feature dim = 128 (lane-dense)

    x = jax.random.normal(ks[0], (N, input_dim), dtype=jnp.float32)
    adj_raw = (jax.random.uniform(ks[1], (N, N)) > 0.7)
    adj = jnp.logical_or(adj_raw, adj_raw.T).astype(jnp.int8)   # undirected 0/1 mask

    def glorot(k, shape):
        lim = math.sqrt(6.0 / (shape[0] + shape[1]))
        return jax.random.uniform(k, shape, minval=-lim, maxval=lim,
                                  dtype=jnp.float32)

    w_l = glorot(ks[2], (input_dim, hc))
    w_r = glorot(ks[3], (input_dim, hc))
    att = glorot(ks[4], (heads, ch))
    b_l = 0.1 * jax.random.normal(ks[5], (hc,), dtype=jnp.float32)
    b_r = 0.1 * jax.random.normal(ks[6], (hc,), dtype=jnp.float32)
    bias = 0.1 * jax.random.normal(ks[7], (hc,), dtype=jnp.float32)

    # tk=128 here (instead of the larger default) so the grid is (2, 2) and the
    # multi-step online-softmax accumulator path is exercised.
    # On v6e/v7x, pass storage_dtype=jnp.bfloat16 for ~2x DMA/MXU throughput.
    out = gatv2_forward(x, adj, w_l, b_l, w_r, b_r, att, bias, tm=128, tk=128,
                        storage_dtype=jnp.float32)
    out = jax.block_until_ready(out)

    ref = gatv2_reference(x, adj, w_l, b_l, w_r, b_r, att, bias)
    assert out.shape == (N, hc)
    max_err = float(jnp.max(jnp.abs(out - ref)))
    assert jnp.allclose(out, ref, atol=2e-3, rtol=2e-3), f"mismatch, max_err={max_err}"

    print("KERNEL_OK")
</pallas_src>

<mosaic_0001>
module attributes {stable_mosaic.version = 11 : i64} {
  func.func @gatv2_proj_kernel(%arg0: i32, %arg1: memref<128x32xf32, #tpu.memory_space<vmem>>, %arg2: memref<32x256xf32, #tpu.memory_space<vmem>>, %arg3: memref<1x256xf32, #tpu.memory_space<vmem>>, %arg4: memref<128x128xf32, #tpu.memory_space<vmem>>, %arg5: memref<128x128xf32, #tpu.memory_space<vmem>>, %arg6: memref<128x128xf32, #tpu.memory_space<vmem>>) attributes {dimension_semantics = [#tpu.dimension_semantics<parallel>], iteration_bounds = array<i64: 2>, scalar_prefetch = 0 : i64, scratch_operands = 0 : i64, tpu.core_type = #tpu.core_type<tc>, window_params = [{transform_indices = @transform_0, window_bounds = array<i64: 128, 32>}, {pipeline_mode = #tpu.pipeline_mode<synchronous>, transform_indices = @transform_1, window_bounds = array<i64: 32, 256>}, {pipeline_mode = #tpu.pipeline_mode<synchronous>, transform_indices = @transform_2, window_bounds = array<i64: 1, 256>}, {transform_indices = @transform_3, window_bounds = array<i64: 128, 128>}, {transform_indices = @transform_4, window_bounds = array<i64: 128, 128>}, {transform_indices = @transform_5, window_bounds = array<i64: 128, 128>}]} {
    %c0 = arith.constant 0 : index
    %c0_0 = arith.constant 0 : index
    %0 = vector.load %arg1[%c0, %c0_0] : memref<128x32xf32, #tpu.memory_space<vmem>>, vector<128x32xf32>
    %c0_1 = arith.constant 0 : index
    %c0_2 = arith.constant 0 : index
    %1 = vector.load %arg2[%c0_1, %c0_2] : memref<32x256xf32, #tpu.memory_space<vmem>>, vector<32x256xf32>
    %cst = arith.constant dense<0.000000e+00> : vector<128x256xf32>
    %2 = tpu.matmul %0, %1, %cst {dimension_numbers = #tpu.dot_dimension_numbers<[1], [0], [0], [1], [0, 0, 1, 1], [], []>} : vector<128x32xf32>, vector<32x256xf32>, vector<128x256xf32> -> vector<128x256xf32>
    %c0_3 = arith.constant 0 : index
    %c0_4 = arith.constant 0 : index
    %3 = vector.load %arg3[%c0_3, %c0_4] : memref<1x256xf32, #tpu.memory_space<vmem>>, vector<1x256xf32>
    %4 = vector.broadcast %3 : vector<1x256xf32> to vector<128x256xf32>
    %5 = arith.addf %2, %4 : vector<128x256xf32>
    %6 = vector.extract_strided_slice %5 {offsets = [0, 0], sizes = [128, 128], strides = [1, 1]} : vector<128x256xf32> to vector<128x128xf32>
    %7 = vector.extract_strided_slice %5 {offsets = [0, 128], sizes = [128, 128], strides = [1, 1]} : vector<128x256xf32> to vector<128x128xf32>
    %c0_5 = arith.constant 0 : index
    %c0_6 = arith.constant 0 : index
    %8 = vector.load %arg4[%c0_5, %c0_6] : memref<128x128xf32, #tpu.memory_space<vmem>>, vector<128x128xf32>
    tpu.vector_store %arg4[%c0_5, %c0_6], %6 {strides = array<i32>} : memref<128x128xf32, #tpu.memory_space<vmem>>, vector<128x128xf32>,
    %c0_7 = arith.constant 0 : index
    %c0_8 = arith.constant 0 : index
    %9 = vector.load %arg5[%c0_7, %c0_8] : memref<128x128xf32, #tpu.memory_space<vmem>>, vector<128x128xf32>
    tpu.vector_store %arg5[%c0_7, %c0_8], %7 {strides = array<i32>} : memref<128x128xf32, #tpu.memory_space<vmem>>, vector<128x128xf32>,
    %10 = tpu.transpose %6, [1, 0] : vector<128x128xf32> -> vector<128x128xf32>
    %c0_9 = arith.constant 0 : index
    %c0_10 = arith.constant 0 : index
    %11 = vector.load %arg6[%c0_9, %c0_10] : memref<128x128xf32, #tpu.memory_space<vmem>>, vector<128x128xf32>
    tpu.vector_store %arg6[%c0_9, %c0_10], %10 {strides = array<i32>} : memref<128x128xf32, #tpu.memory_space<vmem>>, vector<128x128xf32>,
    return
  }
  func.func @transform_0(%arg0: i32) -> (i32, i32) {
    %c0_i32 = arith.constant 0 : i32
    %c0_i32_0 = arith.constant 0 : i32
    return %arg0, %c0_i32 : i32, i32
  }
  func.func @transform_1(%arg0: i32) -> (i32, i32) {
    %c0_i32 = arith.constant 0 : i32
    %c0_i32_0 = arith.constant 0 : i32
    %c0_i32_1 = arith.constant 0 : i32
    return %c0_i32, %c0_i32_0 : i32, i32
  }
  func.func @transform_2(%arg0: i32) -> (i32, i32) {
    %c0_i32 = arith.constant 0 : i32
    %c0_i32_0 = arith.constant 0 : i32
    %c0_i32_1 = arith.constant 0 : i32
    return %c0_i32, %c0_i32_0 : i32, i32
  }
  func.func @transform_3(%arg0: i32) -> (i32, i32) {
    %c0_i32 = arith.constant 0 : i32
    %c0_i32_0 = arith.constant 0 : i32
    return %arg0, %c0_i32 : i32, i32
  }
  func.func @transform_4(%arg0: i32) -> (i32, i32) {
    %c0_i32 = arith.constant 0 : i32
    %c0_i32_0 = arith.constant 0 : i32
    return %arg0, %c0_i32 : i32, i32
  }
  func.func @transform_5(%arg0: i32) -> (i32, i32) {
    %c0_i32 = arith.constant 0 : i32
    %c0_i32_0 = arith.constant 0 : i32
    return %c0_i32, %arg0 : i32, i32
  }
}

</mosaic_0001>

<llo_original>
// kernel: tpu_custom_call.1
$region0: #{tpu_custom_call.1}
  #allocation0 [shape = 'u32[]', space=smem, size = 0x4, offset = 0x4, fixed_abs, tag = 'smem constant byte address 0x4 - core index']
  #allocation1 [shape = 'u32[144,128]{1,0:T(1,128)}', space=vmem, size = 0x12000, scoped, tag = 'internal scratch']
  %s0 = inlined_call_operand.vmem [shape: f32[256,32], index: 0, kind: input, shape index: {}]
  %s1 = inlined_call_operand.vmem [shape: f32[32,256], index: 1, kind: input, shape index: {}]
  %s2 = inlined_call_operand.vmem [shape: f32[1,256], index: 2, kind: input, shape index: {}]
  %s3 = inlined_call_operand.hbm [shape: f32[256,128], index: 3, kind: output, shape index: {0}]
  %s4 = inlined_call_operand.hbm [shape: f32[256,128], index: 4, kind: output, shape index: {1}]
  %s5 = inlined_call_operand.hbm [shape: f32[128,256], index: 5, kind: output, shape index: {2}]
  %6 = xla_tuple %s3, %s4, %s5
  %s7 = sld [smem:[#allocation0]]
  $region61: #{tpu_custom_call.1} parent=0
    _
  %s9 = ssub.s32 1, %s7
  %s10 = scalar_select 0, %s9, %s7
  $region1: #{tpu_custom_call.1} parent=0
    #allocation2 [shape = 'u8[131072]{0}', space=vmem, size = 0x20000, scoped, tag = 'output window, operand 0']
    #allocation3 [shape = 's32[2]{0}', space=sflag, size = 0x8, scoped, tag = 'scoped memory for tpu_custom_call.1']
    #allocation4 [shape = 'u8[131072]{0}', space=vmem, size = 0x20000, scoped, tag = 'output window, operand 1']
    #allocation5 [shape = 's32[2]{0}', space=sflag, size = 0x8, scoped, tag = 'scoped memory for tpu_custom_call.1']
    #allocation6 [shape = 'u8[131072]{0}', space=vmem, size = 0x20000, scoped, tag = 'output window, operand 2']
    %11 = vsyncpa [#allocation3], 0
    %s12 = scalar_lea.sflag [#allocation3], 1
    %13 = vsyncpa %s12, 0
    %14 = vsyncpa [#allocation5], 0
    %s15 = scalar_lea.sflag [#allocation5], 1
    %16 = vsyncpa %s15, 0
    loop: start=0, step=1, limit=4
    $region2: #{tpu_custom_call.1} parent=1 // loop_pre_header
      _
    $region3: #{tpu_custom_call.1} parent=1 // loop_header
      %s18 = sphi 0, %s22
      %p19 = scmp.ge.s32.totalorder %s18, 4
      %s28 = sphi 0, %s30
      %s31 = sphi 0, %s28
      %s32 = sphi 0, %s31
      %s48 = sphi 0, %s32
      %s52 = sphi 0, %s52
      %s54 = sphi 0, %s52
      %s55 = sphi 0, %s54
      %s69 = sphi 0, %s55
      %s73 = sphi 0, %s73
      %s75 = sphi 0, %s73
      %s76 = sphi 0, %s75
      %s90 = sphi 0, %s76
      %s96 = sphi 0, %s98
      %s99 = sphi 0, %s96
      %s100 = sphi 0, %s99
      %s116 = sphi 0, %s100
      %s122 = sphi 0, %s124
      %s125 = sphi 0, %s122
      %s126 = sphi 0, %s125
      %s142 = sphi 0, %s126
      %s148 = sphi 0, %s150
      %s151 = sphi 0, %s148
      %s152 = sphi 0, %s151
      %s168 = sphi 0, %s152
    $region4: #{tpu_custom_call.1} parent=1 // loop_header_branch
      %21 = sbr.rel (%p19) target = $region8
    $region5: #{tpu_custom_call.1} parent=1 // loop_body
      %s23 = ssub.s32 %s18, 1
      %s24 = ssub.s32 %s18, 2
      %s25 = sadd.s32 %s18, 1
      %s26 = ssub.s32 %s18, %s25
      %p27 = scmp.eq.s32.totalorder %s26, 0
      %s29 = sadd.s32 %s28, 1
      %s30 = scalar_select %p27, %s28, %s29
      %p33 = pneg %p27
      %p34 = scmp.eq.s32.totalorder %s18, 1
      %p35 = por %p33, %p34
      %p36 = scmp.ne.s32.totalorder %s28, %s31
      %p37 = scmp.eq.s32.totalorder %s18, 0
      %p38 = por %p36, %p37
      %p39 = scmp.ne.s32.totalorder %s28, %s31
      %p40 = scmp.eq.s32.totalorder %s23, 1
      %p41 = por %p39, %p40
      %p42 = scmp.ne.s32.totalorder %s31, %s32
      %p43 = scmp.eq.s32.totalorder %s23, 0
      %p44 = por %p42, %p43
      %p45 = scmp.ne.s32.totalorder %s31, %s32
      %p46 = scmp.eq.s32.totalorder %s24, 1
      %p47 = por %p45, %p46
      %p49 = scmp.ne.s32.totalorder %s32, %s48
      %p50 = scmp.eq.s32.totalorder %s24, 0
      %p51 = por %p49, %p50
      %s53 = sadd.s32 %s52, 1
      %p56 = scmp.eq.s32.totalorder %s18, 1
      %p57 = scmp.ne.s32.totalorder %s52, %s54
      %p58 = scmp.eq.s32.totalorder %s18, 0
      %p59 = por %p57, %p58
      %p60 = scmp.ne.s32.totalorder %s52, %s54
      %p61 = scmp.eq.s32.totalorder %s23, 1
      %p62 = por %p60, %p61
      %p63 = scmp.ne.s32.totalorder %s54, %s55
      %p64 = scmp.eq.s32.totalorder %s23, 0
      %p65 = por %p63, %p64
      %p66 = scmp.ne.s32.totalorder %s54, %s55
      %p67 = scmp.eq.s32.totalorder %s24, 1
      %p68 = por %p66, %p67
      %p70 = scmp.ne.s32.totalorder %s55, %s69
      %p71 = scmp.eq.s32.totalorder %s24, 0
      %p72 = por %p70, %p71
      %s74 = sadd.s32 %s73, 1
      %p77 = scmp.eq.s32.totalorder %s18, 1
      %p78 = scmp.ne.s32.totalorder %s73, %s75
      %p79 = scmp.eq.s32.totalorder %s18, 0
      %p80 = por %p78, %p79
      %p81 = scmp.ne.s32.totalorder %s73, %s75
      %p82 = scmp.eq.s32.totalorder %s23, 1
      %p83 = por %p81, %p82
      %p84 = scmp.ne.s32.totalorder %s75, %s76
      %p85 = scmp.eq.s32.totalorder %s23, 0
      %p86 = por %p84, %p85
      %p87 = scmp.ne.s32.totalorder %s75, %s76
      %p88 = scmp.eq.s32.totalorder %s24, 1
      %p89 = por %p87, %p88
      %p91 = scmp.ne.s32.totalorder %s76, %s90
      %p92 = scmp.eq.s32.totalorder %s24, 0
      %p93 = por %p91, %p92
      %s94 = ssub.s32 %s18, %s25
      %p95 = scmp.eq.s32.totalorder %s94, 0
      %s97 = sadd.s32 %s96, 1
      %s98 = scalar_select %p95, %s96, %s97
      %p101 = pneg %p95
      %p102 = scmp.eq.s32.totalorder %s18, 1
      %p103 = por %p101, %p102
      %p104 = scmp.ne.s32.totalorder %s96, %s99
      %p105 = scmp.eq.s32.totalorder %s18, 0
      %p106 = por %p104, %p105
      %p107 = scmp.ne.s32.totalorder %s96, %s99
      %p108 = scmp.eq.s32.totalorder %s23, 1
      %p109 = por %p107, %p108
      %p110 = scmp.ne.s32.totalorder %s99, %s100
      %p111 = scmp.eq.s32.totalorder %s23, 0
      %p112 = por %p110, %p111
      %p113 = scmp.ne.s32.totalorder %s99, %s100
      %p114 = scmp.eq.s32.totalorder %s24, 1
      %p115 = por %p113, %p114
      %p117 = scmp.ne.s32.totalorder %s100, %s116
      %p118 = scmp.eq.s32.totalorder %s24, 0
      %p119 = por %p117, %p118
      %s120 = ssub.s32 %s18, %s25
      %p121 = scmp.eq.s32.totalorder %s120, 0
      %s123 = sadd.s32 %s122, 1
      %s124 = scalar_select %p121, %s122, %s123
      %p127 = pneg %p121
      %p128 = scmp.eq.s32.totalorder %s18, 1
      %p129 = por %p127, %p128
      %p130 = scmp.ne.s32.totalorder %s122, %s125
      %p131 = scmp.eq.s32.totalorder %s18, 0
      %p132 = por %p130, %p131
      %p133 = scmp.ne.s32.totalorder %s122, %s125
      %p134 = scmp.eq.s32.totalorder %s23, 1
      %p135 = por %p133, %p134
      %p136 = scmp.ne.s32.totalorder %s125, %s126
      %p137 = scmp.eq.s32.totalorder %s23, 0
      %p138 = por %p136, %p137
      %p139 = scmp.ne.s32.totalorder %s125, %s126
      %p140 = scmp.eq.s32.totalorder %s24, 1
      %p141 = por %p139, %p140
      %p143 = scmp.ne.s32.totalorder %s126, %s142
      %p144 = scmp.eq.s32.totalorder %s24, 0
      %p145 = por %p143, %p144
      %s146 = ssub.s32 %s18, %s25
      %p147 = scmp.eq.s32.totalorder %s146, 0
      %s149 = sadd.s32 %s148, 1
      %s150 = scalar_select %p147, %s148, %s149
      %p153 = pneg %p147
      %p154 = scmp.eq.s32.totalorder %s18, 1
      %p155 = por %p153, %p154
      %p156 = scmp.ne.s32.totalorder %s148, %s151
      %p157 = scmp.eq.s32.totalorder %s18, 0
      %p158 = por %p156, %p157
      %p159 = scmp.ne.s32.totalorder %s148, %s151
      %p160 = scmp.eq.s32.totalorder %s23, 1
      %p161 = por %p159, %p160
      %p162 = scmp.ne.s32.totalorder %s151, %s152
      %p163 = scmp.eq.s32.totalorder %s23, 0
      %p164 = por %p162, %p163
      %p165 = scmp.ne.s32.totalorder %s151, %s152
      %p166 = scmp.eq.s32.totalorder %s24, 1
      %p167 = por %p165, %p166
      %p169 = scmp.ne.s32.totalorder %s152, %s168
      %p170 = scmp.eq.s32.totalorder %s24, 0
      %p171 = por %p169, %p170
      %p172 = scmp.le.s32.totalorder 1, %s18
      %p173 = scmp.lt.s32.totalorder %s18, 3
      %p174 = pnand %p172, %p173
      %p175 = pneg %p174
      // Predicated region
      $region9: #{tpu_custom_call.1} parent=5 // pred_check
        _
      $region10: #{tpu_custom_call.1} parent=5 // pred_check_branch
        %177 = sbr.rel (%p174) target = $region12
      $region11: #{tpu_custom_call.1} parent=5 // pred_region
        %s178 = ssub.s32 %s18, 1
        // Predicated region
        $region13: #{tpu_custom_call.1} parent=11 // pred_check
          %p179 = pneg %p65
        $region14: #{tpu_custom_call.1} parent=11 // pred_check_branch
          %181 = sbr.rel (%p179) target = $region16
        $region15: #{tpu_custom_call.1} parent=11 // pred_region
          _
        $region16: #{tpu_custom_call.1} parent=11 // pred_fallthru
          _
        // Predicated region
        $region17: #{tpu_custom_call.1} parent=11 // pred_check
          %p182 = pneg %p86
        $region18: #{tpu_custom_call.1} parent=11 // pred_check_branch
          %184 = sbr.rel (%p182) target = $region20
        $region19: #{tpu_custom_call.1} parent=11 // pred_region
          _
        $region20: #{tpu_custom_call.1} parent=11 // pred_fallthru
          _
      $region12: #{tpu_custom_call.1} parent=5 // pred_fallthru
        _
      %p185 = scmp.lt.s32.totalorder %s18, 2
      // Predicated region
      $region21: #{tpu_custom_call.1} parent=5 // pred_check
        %p186 = pneg %p185
      $region22: #{tpu_custom_call.1} parent=5 // pred_check_branch
        %188 = sbr.rel (%p186) target = $region24
      $region23: #{tpu_custom_call.1} parent=5 // pred_region
        // Predicated region
        $region25: #{tpu_custom_call.1} parent=23 // pred_check
          %p189 = pneg %p38
        $region26: #{tpu_custom_call.1} parent=23 // pred_check_branch
          %191 = sbr.rel (%p189) target = $region28
        $region27: #{tpu_custom_call.1} parent=23 // pred_region
          %s192 = smul.u32 16, %s18
          %p193 = scmp.lt.s32.totalorder %s192, 31
          %s194 = scalar_select %p193, %s192, 31
          %s195 = smul.addr %s194, 8
          %s196 = scalar_lea.vmem %s0, %s195
          %s197 = smul.u32 16, %s18
        $region28: #{tpu_custom_call.1} parent=23 // pred_fallthru
          _
      $region24: #{tpu_custom_call.1} parent=5 // pred_fallthru
        _
      %p198 = scmp.le.s32.totalorder 1, %s18
      %p199 = scmp.lt.s32.totalorder %s18, 3
      %p200 = pnand %p198, %p199
      %p201 = pneg %p200
      // Predicated region
      $region29: #{tpu_custom_call.1} parent=5 // pred_check
        _
      $region30: #{tpu_custom_call.1} parent=5 // pred_check_branch
        %203 = sbr.rel (%p200) target = $region32
      $region31: #{tpu_custom_call.1} parent=5 // pred_region
        %s204 = ssub.s32 %s18, 1
        %s205 = smul.u32 16, %s23
        %p206 = scmp.lt.s32.totalorder %s205, 31
        %s207 = scalar_select %p206, %s205, 31
        %s208 = smul.addr %s207, 8
        %s209 = scalar_lea.vmem %s0, %s208
        %p210 = pneg %p44
        %p211 = pneg %p41
        %p212 = pneg %p65
        %p213 = pneg %p62
        %p214 = pneg %p86
        %p215 = pneg %p83
        %p216 = pneg %p112
        %p217 = pneg %p109
        %s218 = sand.u32 %s99, 1
        %s219 = scalar_lea.sflag [#allocation3], %s218
        %s220 = sand.u32 %s99, 1
        %s221 = smul.addr %s220, 128
        %s222 = scalar_lea.vmem [#allocation2], %s221
        %p223 = pneg %p138
        %p224 = pneg %p135
        %s225 = sand.u32 %s23, 1
        %s226 = scalar_lea.sflag [#allocation5], %s225
        %s227 = sand.u32 %s125, 1
        %s228 = smul.addr %s227, 128
        %s229 = scalar_lea.vmem [#allocation4], %s228
        %p230 = pneg %p164
        %p231 = pneg %p161
        %s232 = sand.u32 %s23, 1
        %s233 = scalar_lea.sflag [#allocation5], %s232
        %s234 = sand.u32 %s151, 1
        %s235 = smul.addr %s234, 128
        %s236 = scalar_lea.vmem [#allocation6], %s235
        %s237 = smul.u32 16, %s23
        %p238 = scmp.lt.s32.totalorder %s237, 31
        %s239 = scalar_select %p238, %s237, 31
        %s240 = smul.addr %s239, 8
        %s241 = scalar_lea.vmem %s0, %s240
        %s242 = smul.u32 16, %s23
        %s243 = smul.u32 16, %s23
        %s244 = smul.u32 16, %s23
        %v245 = vld [vmem:[%s241] sm:$0xff]
        %v246 = vld [vmem:[%s241 + $0x8] sm:$0xff]
        %v247 = vld [vmem:[%s241 + $0x10] sm:$0xff]
        %v248 = vld [vmem:[%s241 + $0x18] sm:$0xff]
        %v249 = vld [vmem:[%s241 + $0x20] sm:$0xff]
        %v250 = vld [vmem:[%s241 + $0x28] sm:$0xff]
        %v251 = vld [vmem:[%s241 + $0x30] sm:$0xff]
        %v252 = vld [vmem:[%s241 + $0x38] sm:$0xff]
        %v253 = vld [vmem:[%s241 + $0x40] sm:$0xff]
        %v254 = vld [vmem:[%s241 + $0x48] sm:$0xff]
        %v255 = vld [vmem:[%s241 + $0x50] sm:$0xff]
        %v256 = vld [vmem:[%s241 + $0x58] sm:$0xff]
        %v257 = vld [vmem:[%s241 + $0x60] sm:$0xff]
        %v258 = vld [vmem:[%s241 + $0x68] sm:$0xff]
        %v259 = vld [vmem:[%s241 + $0x70] sm:$0xff]
        %v260 = vld [vmem:[%s241 + $0x78] sm:$0xff]
        %v261 = vld [vmem:[%s1] sm:$0xff]
        %v262 = vld [vmem:[%s1 + $0x8] sm:$0xff]
        %v263 = vld [vmem:[%s1 + $0x10] sm:$0xff]
        %v264 = vld [vmem:[%s1 + $0x18] sm:$0xff]
        %v265 = vld [vmem:[%s1 + $0x20] sm:$0xff]
        %v266 = vld [vmem:[%s1 + $0x28] sm:$0xff]
        %v267 = vld [vmem:[%s1 + $0x30] sm:$0xff]
        %v268 = vld [vmem:[%s1 + $0x38] sm:$0xff]
        %v269 = vld [vmem:[%s2] sm:$0x3]
        %v271 = vlaneseq
        %v272 = vshrl.u32 %v271, 7
        %v273 = vsub.s32 0, %v272
        %v274 = vrot.slane %v269, %v273
        %v275 = vlaneseq
        %v276 = vshrl.u32 %v275, 7
        %v277 = vsub.s32 1, %v276
        %v278 = vrot.slane %v269, %v277
        %vm281 = vcmask 261120
        %v283 = vsel %vm281, %v245, 0
        %v286 = vsel %vm281, %v246, 0
        %v289 = vsel %vm281, %v247, 0
        %v292 = vsel %vm281, %v248, 0
        %v295 = vsel %vm281, %v249, 0
        %v298 = vsel %vm281, %v250, 0
        %v301 = vsel %vm281, %v251, 0
        %v304 = vsel %vm281, %v252, 0
        %v307 = vsel %vm281, %v253, 0
        %v310 = vsel %vm281, %v254, 0
        %v313 = vsel %vm281, %v255, 0
        %v316 = vsel %vm281, %v256, 0
        %v319 = vsel %vm281, %v257, 0
        %v322 = vsel %vm281, %v258, 0
        %v325 = vsel %vm281, %v259, 0
        %v328 = vsel %vm281, %v260, 0
        %330 = vmatprep.subr.mxu0 %v262
        %331 = vmatpush1.msra.mxu0 %v261
        %332 = vmatprep.subr.mxu0 %v264
        %333 = vmatpush1.msra.mxu0 %v263
        %334 = vmatprep.subr.mxu0 %v266
        %335 = vmatpush1.msra.mxu0 %v265
        %336 = vmatprep.subr.mxu0 %v268
        %337 = vmatpush1.msra.mxu0 %v267
        %338 = vmatprep.subr.mxu0 0.0
        %339 = vmatpush1.msra.mxu0 0.0
        %340 = vmatprep.subr.mxu0 0.0
        %341 = vmatpush1.msra.mxu0 0.0
        %342 = vmatprep.subr.mxu0 0.0
        %343 = vmatpush1.msra.mxu0 0.0
        %344 = vmatprep.subr.mxu0 0.0
        %345 = vmatpush1.msra.mxu0 0.0
        %346 = vmatprep.subr.mxu0 0.0
        %347 = vmatpush1.msra.mxu0 0.0
        %348 = vmatprep.subr.mxu0 0.0
        %349 = vmatpush1.msra.mxu0 0.0
        %350 = vmatprep.subr.mxu0 0.0
        %351 = vmatpush1.msra.mxu0 0.0
        %352 = vmatprep.subr.mxu0 0.0
        %353 = vmatpush1.msra.mxu0 0.0
        %354 = vmatprep.subr.mxu0 0.0
        %355 = vmatpush1.msra.mxu0 0.0
        %356 = vmatprep.subr.mxu0 0.0
        %357 = vmatpush1.msra.mxu0 0.0
        %358 = vmatprep.subr.mxu0 0.0
        %359 = vmatpush1.msra.mxu0 0.0
        %360 = vmatprep.subr.mxu0 0.0
        %361 = vmatpush1.msra.mxu0 0.0
        %362 = vmatprep.subr.mxu0 0.0
        %363 = vmatpush1.msra.mxu0 0.0
        %364 = vmatprep.subr.mxu0 0.0
        %365 = vmatpush1.msra.mxu0 0.0
        %366 = vmatprep.subr.mxu0 0.0
        %367 = vmatpush1.msra.mxu0 0.0
        %368 = vmatprep.subr.mxu0 0.0
        %369 = vmatpush1.msra.mxu0 0.0
        %370 = vmatprep.subr.mxu0 0.0
        %371 = vmatpush1.msra.mxu0 0.0
        %372 = vmatprep.subr.mxu0 0.0
        %373 = vmatpush1.msra.mxu0 0.0
        %374 = vmatprep.subr.mxu0 0.0
        %375 = vmatpush1.msra.mxu0 0.0
        %376 = vmatprep.subr.mxu0 0.0
        %377 = vmatpush1.msra.mxu0 0.0
        %378 = vmatprep.subr.mxu0 0.0
        %379 = vmatpush1.msra.mxu0 0.0
        %380 = vmatprep.subr.mxu0 0.0
        %381 = vmatpush1.msra.mxu0 0.0
        %382 = vmatprep.subr.mxu0 0.0
        %383 = vmatpush1.msra.mxu0 0.0
        %384 = vmatprep.subr.mxu0 0.0
        %385 = vmatpush1.msra.mxu0 0.0
        %386 = vmatprep.subr.mxu0 0.0
        %387 = vmatpush1.msra.mxu0 0.0
        %388 = vmatprep.subr.mxu0 0.0
        %389 = vmatpush1.msra.mxu0 0.0
        %390 = vmatprep.subr.mxu0 0.0
        %391 = vmatpush1.msra.mxu0 0.0
        %392 = vmatprep.subr.mxu0 0.0
        %393 = vmatpush1.msra.mxu0 0.0
        %394 = vmatprep.mubr.f32.mxu0 0.0
        %395 = vmatmul.mubr.f32.gmra.mrb[0].mxu0 %v283
        %v396 = vpop.f32.mrb[0].mxu0
        %v397 = vadd.f32 %v274, %v396
        %v398 = vpop.f32.mrb[0].mxu0
        %v399 = vadd.f32 %v278, %v398
        %400 = vmatprep.mubr.f32.mxu0 0.0
        %401 = vmatmul.mubr.f32.gmra.mrb[0].mxu0 %v286
        %v402 = vpop.f32.mrb[0].mxu0
        %v403 = vadd.f32 %v274, %v402
        %v404 = vpop.f32.mrb[0].mxu0
        %v405 = vadd.f32 %v278, %v404
        %406 = vmatprep.mubr.f32.mxu0 0.0
        %407 = vmatmul.mubr.f32.gmra.mrb[0].mxu0 %v289
        %v408 = vpop.f32.mrb[0].mxu0
        %v409 = vadd.f32 %v274, %v408
        %v410 = vpop.f32.mrb[0].mxu0
        %v411 = vadd.f32 %v278, %v410
        %412 = vmatprep.mubr.f32.mxu0 0.0
        %413 = vmatmul.mubr.f32.gmra.mrb[0].mxu0 %v292
        %v414 = vpop.f32.mrb[0].mxu0
        %v415 = vadd.f32 %v274, %v414
        %v416 = vpop.f32.mrb[0].mxu0
        %v417 = vadd.f32 %v278, %v416
        %418 = vmatprep.mubr.f32.mxu0 0.0
        %419 = vmatmul.mubr.f32.gmra.mrb[0].mxu0 %v295
        %v420 = vpop.f32.mrb[0].mxu0
        %v421 = vadd.f32 %v274, %v420
        %v422 = vpop.f32.mrb[0].mxu0
        %v423 = vadd.f32 %v278, %v422
        %424 = vmatprep.mubr.f32.mxu0 0.0
        %425 = vmatmul.mubr.f32.gmra.mrb[0].mxu0 %v298
        %v426 = vpop.f32.mrb[0].mxu0
        %v427 = vadd.f32 %v274, %v426
        %v428 = vpop.f32.mrb[0].mxu0
        %v429 = vadd.f32 %v278, %v428
        %430 = vmatprep.mubr.f32.mxu0 0.0
        %431 = vmatmul.mubr.f32.gmra.mrb[0].mxu0 %v301
        %v432 = vpop.f32.mrb[0].mxu0
        %v433 = vadd.f32 %v274, %v432
        %v434 = vpop.f32.mrb[0].mxu0
        %v435 = vadd.f32 %v278, %v434
        %436 = vmatprep.mubr.f32.mxu0 0.0
        %437 = vmatmul.mubr.f32.gmra.mrb[0].mxu0 %v304
        %v438 = vpop.f32.mrb[0].mxu0
        %v439 = vadd.f32 %v274, %v438
        %v440 = vpop.f32.mrb[0].mxu0
        %v441 = vadd.f32 %v278, %v440
        %442 = vmatprep.mubr.f32.mxu0 0.0
        %443 = vmatmul.mubr.f32.gmra.mrb[0].mxu0 %v307
        %v444 = vpop.f32.mrb[0].mxu0
        %v445 = vadd.f32 %v274, %v444
        %v446 = vpop.f32.mrb[0].mxu0
        %v447 = vadd.f32 %v278, %v446
        %448 = vmatprep.mubr.f32.mxu0 0.0
        %449 = vmatmul.mubr.f32.gmra.mrb[0].mxu0 %v310
        %v450 = vpop.f32.mrb[0].mxu0
        %v451 = vadd.f32 %v274, %v450
        %v452 = vpop.f32.mrb[0].mxu0
        %v453 = vadd.f32 %v278, %v452
        %454 = vmatprep.mubr.f32.mxu0 0.0
        %455 = vmatmul.mubr.f32.gmra.mrb[0].mxu0 %v313
        %v456 = vpop.f32.mrb[0].mxu0
        %v457 = vadd.f32 %v274, %v456
        %v458 = vpop.f32.mrb[0].mxu0
        %v459 = vadd.f32 %v278, %v458
        %460 = vmatprep.mubr.f32.mxu0 0.0
        %461 = vmatmul.mubr.f32.gmra.mrb[0].mxu0 %v316
        %v462 = vpop.f32.mrb[0].mxu0
        %v463 = vadd.f32 %v274, %v462
        %v464 = vpop.f32.mrb[0].mxu0
        %v465 = vadd.f32 %v278, %v464
        %466 = vmatprep.mubr.f32.mxu0 0.0
        %467 = vmatmul.mubr.f32.gmra.mrb[0].mxu0 %v319
        %v468 = vpop.f32.mrb[0].mxu0
        %v469 = vadd.f32 %v274, %v468
        %v470 = vpop.f32.mrb[0].mxu0
        %v471 = vadd.f32 %v278, %v470
        %472 = vmatprep.mubr.f32.mxu0 0.0
        %473 = vmatmul.mubr.f32.gmra.mrb[0].mxu0 %v322
        %v474 = vpop.f32.mrb[0].mxu0
        %v475 = vadd.f32 %v274, %v474
        %v476 = vpop.f32.mrb[0].mxu0
        %v477 = vadd.f32 %v278, %v476
        %478 = vmatprep.mubr.f32.mxu0 0.0
        %479 = vmatmul.mubr.f32.gmra.mrb[0].mxu0 %v325
        %v480 = vpop.f32.mrb[0].mxu0
        %v481 = vadd.f32 %v274, %v480
        %v482 = vpop.f32.mrb[0].mxu0
        %v483 = vadd.f32 %v278, %v482
        %484 = vmatprep.mubr.f32.mxu0 0.0
        %485 = vmatmul.mubr.f32.gmra.mrb[0].mxu0 %v328
        %v486 = vpop.f32.mrb[0].mxu0
        %v487 = vadd.f32 %v274, %v486
        %v488 = vpop.f32.mrb[0].mxu0
        %v489 = vadd.f32 %v278, %v488
        %490 = vdwg.mxu0
        %491 = vst [vmem:[%s222] sm:$0xff] %v397
        %492 = vst [vmem:[%s222 + $0x8] sm:$0xff] %v403
        %493 = vst [vmem:[%s222 + $0x10] sm:$0xff] %v409
        %494 = vst [vmem:[%s222 + $0x18] sm:$0xff] %v415
        %495 = vst [vmem:[%s222 + $0x20] sm:$0xff] %v421
        %496 = vst [vmem:[%s222 + $0x28] sm:$0xff] %v427
        %497 = vst [vmem:[%s222 + $0x30] sm:$0xff] %v433
        %498 = vst [vmem:[%s222 + $0x38] sm:$0xff] %v439
        %499 = vst [vmem:[%s222 + $0x40] sm:$0xff] %v445
        %500 = vst [vmem:[%s222 + $0x48] sm:$0xff] %v451
        %501 = vst [vmem:[%s222 + $0x50] sm:$0xff] %v457
        %502 = vst [vmem:[%s222 + $0x58] sm:$0xff] %v463
        %503 = vst [vmem:[%s222 + $0x60] sm:$0xff] %v469
        %504 = vst [vmem:[%s222 + $0x68] sm:$0xff] %v475
        %505 = vst [vmem:[%s222 + $0x70] sm:$0xff] %v481
        %506 = vst [vmem:[%s222 + $0x78] sm:$0xff] %v487
        %507 = vst [vmem:[%s229] sm:$0xff] %v399
        %508 = vst [vmem:[%s229 + $0x8] sm:$0xff] %v405
        %509 = vst [vmem:[%s229 + $0x10] sm:$0xff] %v411
        %510 = vst [vmem:[%s229 + $0x18] sm:$0xff] %v417
        %511 = vst [vmem:[%s229 + $0x20] sm:$0xff] %v423
        %512 = vst [vmem:[%s229 + $0x28] sm:$0xff] %v429
        %513 = vst [vmem:[%s229 + $0x30] sm:$0xff] %v435
        %514 = vst [vmem:[%s229 + $0x38] sm:$0xff] %v441
        %515 = vst [vmem:[%s229 + $0x40] sm:$0xff] %v447
        %516 = vst [vmem:[%s229 + $0x48] sm:$0xff] %v453
        %517 = vst [vmem:[%s229 + $0x50] sm:$0xff] %v459
        %518 = vst [vmem:[%s229 + $0x58] sm:$0xff] %v465
        %519 = vst [vmem:[%s229 + $0x60] sm:$0xff] %v471
        %520 = vst [vmem:[%s229 + $0x68] sm:$0xff] %v477
        %521 = vst [vmem:[%s229 + $0x70] sm:$0xff] %v483
        %522 = vst [vmem:[%s229 + $0x78] sm:$0xff] %v489
        %523 = vxpose.xlu0.b32.start [1/16] %v397, 128
        %524 = vxpose.xlu0.b32.cont [2/16] %v403, 128
        %525 = vxpose.xlu0.b32.cont [3/16] %v409, 128
        %526 = vxpose.xlu0.b32.cont [4/16] %v415, 128
        %527 = vxpose.xlu0.b32.cont [5/16] %v421, 128
        %528 = vxpose.xlu0.b32.cont [6/16] %v427, 128
        %529 = vxpose.xlu0.b32.cont [7/16] %v433, 128
        %530 = vxpose.xlu0.b32.cont [8/16] %v439, 128
        %531 = vxpose.xlu0.b32.cont [9/16] %v445, 128
        %532 = vxpose.xlu0.b32.cont [10/16] %v451, 128
        %533 = vxpose.xlu0.b32.cont [11/16] %v457, 128
        %534 = vxpose.xlu0.b32.cont [12/16] %v463, 128
        %535 = vxpose.xlu0.b32.cont [13/16] %v469, 128
        %536 = vxpose.xlu0.b32.cont [14/16] %v475, 128
        %537 = vxpose.xlu0.b32.cont [15/16] %v481, 128
        %538 = vxpose.xlu0.b32.end [16/16] %v487, 128
        %v539 = vpop.trf.xlu0
        %v540 = vpop.trf.xlu0
        %v541 = vpop.trf.xlu0
        %v542 = vpop.trf.xlu0
        %v543 = vpop.trf.xlu0
        %v544 = vpop.trf.xlu0
        %v545 = vpop.trf.xlu0
        %v546 = vpop.trf.xlu0
        %v547 = vpop.trf.xlu0
        %v548 = vpop.trf.xlu0
        %v549 = vpop.trf.xlu0
        %v550 = vpop.trf.xlu0
        %v551 = vpop.trf.xlu0
        %v552 = vpop.trf.xlu0
        %v553 = vpop.trf.xlu0
        %v554 = vpop.trf.xlu0
        %555 = vst [vmem:[%s236] sm:$0xff] %v539
        %556 = vst [vmem:[%s236 + $0x8] sm:$0xff] %v540
        %557 = vst [vmem:[%s236 + $0x10] sm:$0xff] %v541
        %558 = vst [vmem:[%s236 + $0x18] sm:$0xff] %v542
        %559 = vst [vmem:[%s236 + $0x20] sm:$0xff] %v543
        %560 = vst [vmem:[%s236 + $0x28] sm:$0xff] %v544
        %561 = vst [vmem:[%s236 + $0x30] sm:$0xff] %v545
        %562 = vst [vmem:[%s236 + $0x38] sm:$0xff] %v546
        %563 = vst [vmem:[%s236 + $0x40] sm:$0xff] %v547
        %564 = vst [vmem:[%s236 + $0x48] sm:$0xff] %v548
        %565 = vst [vmem:[%s236 + $0x50] sm:$0xff] %v549
        %566 = vst [vmem:[%s236 + $0x58] sm:$0xff] %v550
        %567 = vst [vmem:[%s236 + $0x60] sm:$0xff] %v551
        %568 = vst [vmem:[%s236 + $0x68] sm:$0xff] %v552
        %569 = vst [vmem:[%s236 + $0x70] sm:$0xff] %v553
        %570 = vst [vmem:[%s236 + $0x78] sm:$0xff] %v554
        %s571 = sand.u32 %s99, 1
        %s572 = scalar_lea.sflag [#allocation3], %s571
        %s573 = sand.u32 %s99, 1
        %s574 = smul.addr %s573, 128
        %s575 = scalar_lea.vmem [#allocation2], %s574
        %s576 = sand.u32 %s23, 1
        %s577 = scalar_lea.sflag [#allocation5], %s576
        %s578 = sand.u32 %s125, 1
        %s579 = smul.addr %s578, 128
        %s580 = scalar_lea.vmem [#allocation4], %s579
        %s581 = sand.u32 %s23, 1
        %s582 = scalar_lea.sflag [#allocation5], %s581
        %s583 = sand.u32 %s151, 1
        %s584 = smul.addr %s583, 128
        %s585 = scalar_lea.vmem [#allocation6], %s584
        // Predicated region
        $region33: #{tpu_custom_call.1} parent=31 // pred_check
          %p586 = pneg %p109
        $region34: #{tpu_custom_call.1} parent=31 // pred_check_branch
          %588 = sbr.rel (%p586) target = $region36
        $region35: #{tpu_custom_call.1} parent=31 // pred_region
          %s589 = smul.u32 16, %s23
          %s591 = ssub.s32 2048, 2048
          %592 = vsyncadd %s572, %s591
          %s593 = smul.addr %s589, 128
          %s594 = scalar_lea.hbm %s3, %s593
          %s595 = sshll.u32 %s575, 4
          %s596 = int_to_ptr.vmem [resolvable:$true] %s595
          %601 = dma.vmem_to_hbm [thread:$0]  %s596, 2048, %s594, %s572, 128, 128, 8
        $region36: #{tpu_custom_call.1} parent=31 // pred_fallthru
          _
        // Predicated region
        $region37: #{tpu_custom_call.1} parent=31 // pred_check
          %p602 = pneg %p135
        $region38: #{tpu_custom_call.1} parent=31 // pred_check_branch
          %604 = sbr.rel (%p602) target = $region40
        $region39: #{tpu_custom_call.1} parent=31 // pred_region
          %s605 = smul.u32 16, %s23
          %s607 = ssub.s32 2048, 2048
          %608 = vsyncadd %s577, %s607
          %s609 = smul.addr %s605, 128
          %s610 = scalar_lea.hbm %s4, %s609
          %s611 = sshll.u32 %s580, 4
          %s612 = int_to_ptr.vmem [resolvable:$true] %s611
          %617 = dma.vmem_to_hbm [thread:$0]  %s612, 2048, %s610, %s577, 128, 128, 8
        $region40: #{tpu_custom_call.1} parent=31 // pred_fallthru
          _
        // Predicated region
        $region41: #{tpu_custom_call.1} parent=31 // pred_check
          %p618 = pneg %p161
        $region42: #{tpu_custom_call.1} parent=31 // pred_check_branch
          %620 = sbr.rel (%p618) target = $region44
        $region43: #{tpu_custom_call.1} parent=31 // pred_region
          %s622 = ssub.s32 2048, 2048
          %623 = vsyncadd %s582, %s622
          %s624 = smul.addr %s23, 128
          %s625 = scalar_lea.hbm %s5, %s624
          %s626 = sshll.u32 %s585, 4
          %s627 = int_to_ptr.vmem [resolvable:$true] %s626
          %632 = dma.vmem_to_hbm [thread:$0]  %s627, 2048, %s625, %s582, 128, 256, 8
        $region44: #{tpu_custom_call.1} parent=31 // pred_fallthru
          _
      $region32: #{tpu_custom_call.1} parent=5 // pred_fallthru
        _
      %p633 = scmp.le.s32.totalorder 2, %s18
      // Predicated region
      $region45: #{tpu_custom_call.1} parent=5 // pred_check
        %p634 = pneg %p633
      $region46: #{tpu_custom_call.1} parent=5 // pred_check_branch
        %636 = sbr.rel (%p634) target = $region48
      $region47: #{tpu_custom_call.1} parent=5 // pred_region
        %s637 = ssub.s32 %s18, 2
        // Predicated region
        $region49: #{tpu_custom_call.1} parent=47 // pred_check
          %p638 = pneg %p115
        $region50: #{tpu_custom_call.1} parent=47 // pred_check_branch
          %640 = sbr.rel (%p638) target = $region52
        $region51: #{tpu_custom_call.1} parent=47 // pred_region
          %s641 = sand.u32 %s100, 1
          %s642 = scalar_lea.sflag [#allocation3], %s641
          %s643 = sand.u32 %s100, 1
          %s644 = smul.addr %s643, 128
          %s645 = scalar_lea.vmem [#allocation2], %s644
          %646 = dma.done %s642, 2048
        $region52: #{tpu_custom_call.1} parent=47 // pred_fallthru
          _
        // Predicated region
        $region53: #{tpu_custom_call.1} parent=47 // pred_check
          %p647 = pneg %p141
        $region54: #{tpu_custom_call.1} parent=47 // pred_check_branch
          %649 = sbr.rel (%p647) target = $region56
        $region55: #{tpu_custom_call.1} parent=47 // pred_region
          %s650 = sand.u32 %s24, 1
          %s651 = scalar_lea.sflag [#allocation5], %s650
          %s652 = sand.u32 %s126, 1
          %s653 = smul.addr %s652, 128
          %s654 = scalar_lea.vmem [#allocation4], %s653
          %655 = dma.done %s651, 2048
        $region56: #{tpu_custom_call.1} parent=47 // pred_fallthru
          _
        // Predicated region
        $region57: #{tpu_custom_call.1} parent=47 // pred_check
          %p656 = pneg %p167
        $region58: #{tpu_custom_call.1} parent=47 // pred_check_branch
          %658 = sbr.rel (%p656) target = $region60
        $region59: #{tpu_custom_call.1} parent=47 // pred_region
          %s659 = sand.u32 %s24, 1
          %s660 = scalar_lea.sflag [#allocation5], %s659
          %s661 = sand.u32 %s152, 1
          %s662 = smul.addr %s661, 128
          %s663 = scalar_lea.vmem [#allocation6], %s662
          %664 = dma.done %s660, 2048
        $region60: #{tpu_custom_call.1} parent=47 // pred_fallthru
          _
      $region48: #{tpu_custom_call.1} parent=5 // pred_fallthru
        _
    $region6: #{tpu_custom_call.1} parent=1 // loop_footer
      %s22 = sadd.s32 1, %s18
    $region7: #{tpu_custom_call.1} parent=1 // loop_footer_branch
      %17 = sbr.rel target = $region3
    $region8: #{tpu_custom_call.1} parent=1 // loop_exit
      _
    %665 = vsyncpa [#allocation3], 1
    %s666 = scalar_lea.sflag [#allocation3], 1
    %667 = vsyncpa %s666, 1
    %668 = vsyncpa [#allocation5], 1
    %s669 = scalar_lea.sflag [#allocation5], 1
    %670 = vsyncpa %s669, 1

</llo_original>
